<compile_context>
chip_gen: v5e
topology: v5e:2x2
jax: 0.10.0
libtpu: 0.0.40
codegen_flags: <defaults>
</compile_context>

<pallas_src>
import functools

import jax
import jax.numpy as jnp
from jax.experimental import pallas as pl
from jax.experimental.pallas import tpu as pltpu


def _round_up(v, m):
    return ((v + m - 1) // m) * m


# --------------------------------------------------------------------------
# Kernel bodies (one batch element x one L tile per grid step, NCL layout)
# --------------------------------------------------------------------------

def _conv_kernel_im2col(x_ref, h_ref, w_ref, b_ref, o_ref, *, k_max, l_tile):
    # x_ref: (Cin_p, l_tile)         main input tile
    # h_ref: (Cin_p, 128)            right halo (next 128 input columns)
    # w_ref: (Cout_p, k_max*Cin_p)   fused, center-aligned, im2col-ordered
    # b_ref: (Cout_p, 1)
    # o_ref: (Cout_p, l_tile)
    xcat = jnp.concatenate([x_ref[...], h_ref[...]], axis=-1)    # (Cin_p, l_tile+128)
    # im2col rows [t*Cin_p:(t+1)*Cin_p] = x shifted by tap t; each piece has
    # Cin_p (multiple of 8) sublanes so the sublane concat is tile aligned.
    x_win = jnp.concatenate(
        [xcat[:, t:t + l_tile] for t in range(k_max)], axis=0)   # (k_max*Cin_p, l_tile)
    y = jnp.dot(w_ref[...], x_win, preferred_element_type=jnp.float32)
    o_ref[...] = (y + b_ref[...]).astype(o_ref.dtype)


def _conv_kernel_taps(x_ref, h_ref, w_ref, b_ref, o_ref, *, k_max, l_tile):
    # w_ref: (k_max, Cout_p, Cin_p).  No im2col temp: k_max accumulated dots.
    xcat = jnp.concatenate([x_ref[...], h_ref[...]], axis=-1)    # (Cin_p, l_tile+128)
    c_out_p = w_ref.shape[1]
    acc = jnp.zeros((c_out_p, l_tile), jnp.float32)
    for t in range(k_max):                                       # static unroll, k_max small
        acc = acc + jnp.dot(w_ref[t], xcat[:, t:t + l_tile],
                            preferred_element_type=jnp.float32)
    o_ref[...] = (acc + b_ref[...]).astype(o_ref.dtype)


# --------------------------------------------------------------------------
# Wrapper
# --------------------------------------------------------------------------

def _pick_l_tile(l_out, c_in_p, c_out_p, k_max, in_isz, out_isz, use_im2col,
                 budget_bytes=10 * 1024 * 1024, cap=2048):
    """Largest 128-multiple L tile whose per-step VMEM estimate fits the budget."""
    l_tile = min(_round_up(max(l_out, 1), 128), cap)

    def est(lt):
        xin = 2 * c_in_p * (lt + 128) * in_isz          # main block, double-buffered
        halo = 2 * c_in_p * 128 * in_isz
        out = 2 * c_out_p * lt * out_isz
        w = c_out_p * k_max * c_in_p * in_isz
        xcat = c_in_p * (lt + 128) * in_isz
        acc = c_out_p * lt * 4
        im2col = (k_max * c_in_p * lt * in_isz) if use_im2col else 0
        return xin + halo + out + w + xcat + acc + im2col

    while l_tile > 128 and est(l_tile) > budget_bytes:
        l_tile -= 128
    return l_tile


def fused_multi_conv1d(x_ncl, w_fused, b_fused, *, k_max, c_in, c_in_p, c_out_p,
                       c_out_valid, use_im2col, compute_dtype,
                       out_dtype=None, l_tile=None):
    """All branches of MultiKernelConv1d in one pallas_call (stride=1, 'same')."""
    n, c_in_x, l = x_ncl.shape
    assert c_in_x == c_in, (c_in_x, c_in)
    assert k_max <= 129, "128-lane halo block must cover k_max-1 taps"
    out_dtype = x_ncl.dtype if out_dtype is None else out_dtype

    pad_halo = (k_max - 1) // 2
    l_out = l                                   # odd kernels, stride 1, 'same'
    in_isz = jnp.dtype(compute_dtype).itemsize
    out_isz = jnp.dtype(out_dtype).itemsize

    if l_tile is None:
        l_tile = _pick_l_tile(l_out, c_in_p, c_out_p, k_max, in_isz, out_isz,
                              use_im2col)
    assert l_tile % 128 == 0
    n_l = -(-l_out // l_tile)
    l_out_pad = n_l * l_tile
    # Input length: every main block (l_tile) and every halo block (128 lanes
    # starting at the next block boundary) must be fully in-bounds.
    l_x = max(l_out_pad + 128, _round_up(l + 2 * pad_halo, 128))

    # Single fused pad: halo + right L alignment + channel pad to a multiple
    # of 8 (padded channels only ever hit zero weights -> exact no-ops).
    x_c = x_ncl.astype(compute_dtype)
    x_pad = jnp.pad(x_c, ((0, 0), (0, c_in_p - c_in),
                          (pad_halo, l_x - pad_halo - l)))

    kern = functools.partial(
        _conv_kernel_im2col if use_im2col else _conv_kernel_taps,
        k_max=k_max, l_tile=l_tile)

    halo_stride = l_tile // 128
    if use_im2col:
        w_spec = pl.BlockSpec(w_fused.shape, lambda i, j: (0, 0))
    else:
        w_spec = pl.BlockSpec(w_fused.shape, lambda i, j: (0, 0, 0))

    cost = pl.CostEstimate(
        flops=int(2 * n * c_out_p * k_max * c_in_p * l_out_pad),
        transcendentals=0,
        bytes_accessed=int(x_pad.size * in_isz
                           + n * c_out_p * l_out_pad * out_isz
                           + w_fused.size * in_isz + b_fused.size * 4))

    out = pl.pallas_call(
        kern,
        out_shape=jax.ShapeDtypeStruct((n, c_out_p, l_out_pad), out_dtype),
        grid=(n, n_l),
        in_specs=[
            # main input tile (batch dim squeezed out of the kernel view)
            pl.BlockSpec((None, c_in_p, l_tile), lambda i, j: (i, 0, j)),
            # 128-lane right halo = first lanes of the NEXT L block (same array)
            pl.BlockSpec((None, c_in_p, 128),
                         lambda i, j: (i, 0, (j + 1) * halo_stride)),
            w_spec,                                          # grid-invariant
            pl.BlockSpec(b_fused.shape, lambda i, j: (0, 0)),  # grid-invariant
        ],
        out_specs=pl.BlockSpec((None, c_out_p, l_tile), lambda i, j: (i, 0, j)),
        compiler_params=pltpu.CompilerParams(
            dimension_semantics=("parallel", "parallel"),
            vmem_limit_bytes=32 * 1024 * 1024),
        cost_estimate=cost,
    )(x_pad, x_pad, w_fused, b_fused)

    if c_out_p != c_out_valid or l_out_pad != l_out:
        out = out[:, :c_out_valid, :l_out]
    return out


class MultiKernelConv1dPallas:
    """Pallas port of MultiKernelConv1d: parallel Conv1d branches, concat on channels."""

    def __init__(self, in_channels, out_channels, kernel_sizes, stride=1, *,
                 key, compute_dtype=jnp.float32):
        assert stride == 1
        assert all(k % 2 == 1 for k in kernel_sizes), (
            "even kernel sizes change the output length under padding=(k-1)//2, "
            "which would break the channel-axis concat")
        self.kernel_sizes = tuple(kernel_sizes)
        self.in_channels = in_channels
        self.out_channels = out_channels
        self.k_max = max(self.kernel_sizes)
        self.compute_dtype = compute_dtype

        keys = jax.random.split(key, 2 * len(kernel_sizes))
        self.params = []
        for i, k in enumerate(kernel_sizes):
            # Mirror nn.Conv1d's U(-1/sqrt(fan_in), 1/sqrt(fan_in)) init.
            bound = 1.0 / float(in_channels * k) ** 0.5
            w = jax.random.uniform(keys[2 * i], (out_channels, in_channels, k),
                                   jnp.float32, -bound, bound)   # torch (O, I, K)
            b = jax.random.uniform(keys[2 * i + 1], (out_channels,),
                                   jnp.float32, -bound, bound)
            self.params.append((w, b))

        self.c_in_p = _round_up(in_channels, 8)
        self.c_out_total = out_channels * len(kernel_sizes)
        self.c_out_p = _round_up(self.c_out_total, 8)
        # im2col (one big K = k_max*Cin_p dot) only when Cin is tiny; otherwise
        # per-tap accumulation (no im2col temp, Cin alone already feeds the MXU).
        self.use_im2col = self.c_in_p < 32

        # ---- one-time fused weight prep ------------------------------------
        # Zero-pad every branch to k_max taps (CENTER aligned) and stack along
        # Cout; pad Cin/Cout to multiples of 8.
        w_blocks, b_blocks = [], []
        for (w, b), k in zip(self.params, self.kernel_sizes):
            d = (self.k_max - k) // 2                       # center alignment
            w_k = jnp.pad(w, ((0, 0), (0, self.c_in_p - in_channels),
                              (d, self.k_max - k - d)))     # (O, Cin_p, k_max)
            w_blocks.append(w_k)
            b_blocks.append(b)
        w_all = jnp.concatenate(w_blocks, axis=0)           # (O_tot, Cin_p, k_max)
        w_all = jnp.pad(w_all, ((0, self.c_out_p - self.c_out_total),
                                (0, 0), (0, 0)))            # (Cout_p, Cin_p, k_max)
        b_all = jnp.pad(jnp.concatenate(b_blocks),
                        (0, self.c_out_p - self.c_out_total))
        self.b_fused = b_all.reshape(self.c_out_p, 1).astype(jnp.float32)

        if self.use_im2col:
            # (Cout_p, k_max*Cin_p): column index = t*Cin_p + ci (tap-major).
            self.w_fused = jnp.transpose(w_all, (0, 2, 1)).reshape(
                self.c_out_p, self.k_max * self.c_in_p).astype(compute_dtype)
        else:
            # (k_max, Cout_p, Cin_p): one (Cout_p, Cin_p) matrix per tap.
            self.w_fused = jnp.transpose(w_all, (2, 0, 1)).astype(compute_dtype)

    def __call__(self, x_ncl, *, l_tile=None):
        return fused_multi_conv1d(
            x_ncl, self.w_fused, self.b_fused,
            k_max=self.k_max, c_in=self.in_channels,
            c_in_p=self.c_in_p, c_out_p=self.c_out_p,
            c_out_valid=self.c_out_total, use_im2col=self.use_im2col,
            compute_dtype=self.compute_dtype, out_dtype=x_ncl.dtype,
            l_tile=l_tile)


def _reference(x_ncl, params, kernel_sizes):
    outs = []
    for (w, b), k in zip(params, kernel_sizes):
        pad = (k - 1) // 2
        y = jax.lax.conv_general_dilated(
            x_ncl, w, window_strides=(1,), padding=[(pad, pad)],
            dimension_numbers=("NCH", "OIH", "NCH"))
        outs.append(y + b[None, :, None])
    return jnp.concatenate(outs, axis=1)


if __name__ == "__main__":
    key = jax.random.PRNGKey(0)
    kx, kp, kx2, kp2 = jax.random.split(key, 4)

    # ---- test 1: module-spec sizes (im2col path, single L tile, f32) -------
    batch, in_ch, length, out_ch = 2, 4, 16, 8
    ks = [1, 3, 5]
    x = jax.random.normal(kx, (batch, in_ch, length), dtype=jnp.float32)
    model = MultiKernelConv1dPallas(in_ch, out_ch, ks, key=kp)
    y = jax.block_until_ready(model(x))
    assert y.shape == (batch, out_ch * len(ks), length), y.shape
    y_ref = _reference(x, model.params, ks)
    assert jnp.allclose(y, y_ref, atol=1e-5, rtol=1e-5), \
        float(jnp.max(jnp.abs(y - y_ref)))

    # ---- test 2: tap-loop path, multiple L tiles (halo), Cout padding ------
    b2n, in2, l2, o2 = 2, 40, 300, 10
    ks2 = [3, 7]
    x2 = jax.random.normal(kx2, (b2n, in2, l2), dtype=jnp.float32)
    model2 = MultiKernelConv1dPallas(in2, o2, ks2, key=kp2)
    y2 = jax.block_until_ready(model2(x2, l_tile=128))   # force 3 L tiles
    assert y2.shape == (b2n, o2 * len(ks2), l2), y2.shape
    y2_ref = _reference(x2, model2.params, ks2)
    assert jnp.allclose(y2, y2_ref, atol=1e-4, rtol=1e-4), \
        float(jnp.max(jnp.abs(y2 - y2_ref)))

    # ---- test 3: bf16 MXU inputs (v6e/v7x fast path), f32 accumulate -------
    model3 = MultiKernelConv1dPallas(in_ch, out_ch, ks, key=kp,
                                     compute_dtype=jnp.bfloat16)
    y3 = jax.block_until_ready(model3(x))
    assert y3.shape == y.shape and y3.dtype == x.dtype
    assert jnp.allclose(y3, y_ref, atol=1e-1, rtol=1e-1), \
        float(jnp.max(jnp.abs(y3 - y_ref)))

    print("KERNEL_OK")
</pallas_src>

<mosaic_0001>
module attributes {stable_mosaic.version = 11 : i64} {
  func.func @_conv_kernel_im2col(%arg0: i32, %arg1: i32, %arg2: memref<1x8x128xf32, #tpu.memory_space<vmem>>, %arg3: memref<1x8x128xf32, #tpu.memory_space<vmem>>, %arg4: memref<24x40xf32, #tpu.memory_space<vmem>>, %arg5: memref<24x1xf32, #tpu.memory_space<vmem>>, %arg6: memref<1x24x128xf32, #tpu.memory_space<vmem>>) attributes {dimension_semantics = [#tpu.dimension_semantics<parallel>, #tpu.dimension_semantics<parallel>], iteration_bounds = array<i64: 2, 1>, scalar_prefetch = 0 : i64, scratch_operands = 0 : i64, tpu.core_type = #tpu.core_type<tc>, window_params = [{transform_indices = @transform_0, window_bounds = array<i64: 1, 8, 128>}, {transform_indices = @transform_1, window_bounds = array<i64: 1, 8, 128>}, {pipeline_mode = #tpu.pipeline_mode<synchronous>, transform_indices = @transform_2, window_bounds = array<i64: 24, 40>}, {pipeline_mode = #tpu.pipeline_mode<synchronous>, transform_indices = @transform_3, window_bounds = array<i64: 24, 1>}, {transform_indices = @transform_4, window_bounds = array<i64: 1, 24, 128>}]} {
    %c0 = arith.constant 0 : index
    %c0_0 = arith.constant 0 : index
    %c0_1 = arith.constant 0 : index
    %0 = vector.load %arg2[%c0, %c0_0, %c0_1] : memref<1x8x128xf32, #tpu.memory_space<vmem>>, vector<1x8x128xf32>
    %1 = vector.shape_cast %0 : vector<1x8x128xf32> to vector<8x128xf32>
    %c0_2 = arith.constant 0 : index
    %c0_3 = arith.constant 0 : index
    %c0_4 = arith.constant 0 : index
    %2 = vector.load %arg3[%c0_2, %c0_3, %c0_4] : memref<1x8x128xf32, #tpu.memory_space<vmem>>, vector<1x8x128xf32>
    %3 = vector.shape_cast %2 : vector<1x8x128xf32> to vector<8x128xf32>
    %4 = tpu.concatenate %1, %3 in 1 : vector<8x128xf32>, vector<8x128xf32> -> vector<8x256xf32>
    %5 = vector.extract_strided_slice %4 {offsets = [0, 0], sizes = [8, 128], strides = [1, 1]} : vector<8x256xf32> to vector<8x128xf32>
    %6 = vector.extract_strided_slice %4 {offsets = [0, 1], sizes = [8, 128], strides = [1, 1]} : vector<8x256xf32> to vector<8x128xf32>
    %7 = vector.extract_strided_slice %4 {offsets = [0, 2], sizes = [8, 128], strides = [1, 1]} : vector<8x256xf32> to vector<8x128xf32>
    %8 = vector.extract_strided_slice %4 {offsets = [0, 3], sizes = [8, 128], strides = [1, 1]} : vector<8x256xf32> to vector<8x128xf32>
    %9 = vector.extract_strided_slice %4 {offsets = [0, 4], sizes = [8, 128], strides = [1, 1]} : vector<8x256xf32> to vector<8x128xf32>
    %10 = tpu.concatenate %5, %6, %7, %8, %9 in 0 : vector<8x128xf32>, vector<8x128xf32>, vector<8x128xf32>, vector<8x128xf32>, vector<8x128xf32> -> vector<40x128xf32>
    %c0_5 = arith.constant 0 : index
    %c0_6 = arith.constant 0 : index
    %11 = vector.load %arg4[%c0_5, %c0_6] : memref<24x40xf32, #tpu.memory_space<vmem>>, vector<24x40xf32>
    %cst = arith.constant dense<0.000000e+00> : vector<24x128xf32>
    %12 = tpu.matmul %11, %10, %cst {dimension_numbers = #tpu.dot_dimension_numbers<[1], [0], [0], [1], [0, 0, 1, 1], [], []>} : vector<24x40xf32>, vector<40x128xf32>, vector<24x128xf32> -> vector<24x128xf32>
    %c0_7 = arith.constant 0 : index
    %c0_8 = arith.constant 0 : index
    %13 = vector.load %arg5[%c0_7, %c0_8] : memref<24x1xf32, #tpu.memory_space<vmem>>, vector<24x1xf32>
    %14 = vector.broadcast %13 : vector<24x1xf32> to vector<24x128xf32>
    %15 = arith.addf %12, %14 : vector<24x128xf32>
    %c0_9 = arith.constant 0 : index
    %c0_10 = arith.constant 0 : index
    %c0_11 = arith.constant 0 : index
    %16 = vector.load %arg6[%c0_9, %c0_10, %c0_11] : memref<1x24x128xf32, #tpu.memory_space<vmem>>, vector<1x24x128xf32>
    %17 = vector.shape_cast %16 : vector<1x24x128xf32> to vector<24x128xf32>
    %18 = vector.shape_cast %15 : vector<24x128xf32> to vector<1x24x128xf32>
    tpu.vector_store %arg6[%c0_9, %c0_10, %c0_11], %18 {strides = array<i32>} : memref<1x24x128xf32, #tpu.memory_space<vmem>>, vector<1x24x128xf32>,
    return
  }
  func.func @transform_0(%arg0: i32, %arg1: i32) -> (i32, i32, i32) {
    %c0_i32 = arith.constant 0 : i32
    %c0_i32_0 = arith.constant 0 : i32
    return %arg0, %c0_i32, %arg1 : i32, i32, i32
  }
  func.func @transform_1(%arg0: i32, %arg1: i32) -> (i32, i32, i32) {
    %c1_i32 = arith.constant 1 : i32
    %0 = arith.addi %arg1, %c1_i32 : i32
    %c1_i32_0 = arith.constant 1 : i32
    %1 = arith.muli %0, %c1_i32_0 : i32
    %c0_i32 = arith.constant 0 : i32
    %c0_i32_1 = arith.constant 0 : i32
    return %arg0, %c0_i32, %1 : i32, i32, i32
  }
  func.func @transform_2(%arg0: i32, %arg1: i32) -> (i32, i32) {
    %c0_i32 = arith.constant 0 : i32
    %c0_i32_0 = arith.constant 0 : i32
    %c0_i32_1 = arith.constant 0 : i32
    return %c0_i32, %c0_i32_0 : i32, i32
  }
  func.func @transform_3(%arg0: i32, %arg1: i32) -> (i32, i32) {
    %c0_i32 = arith.constant 0 : i32
    %c0_i32_0 = arith.constant 0 : i32
    %c0_i32_1 = arith.constant 0 : i32
    return %c0_i32, %c0_i32_0 : i32, i32
  }
  func.func @transform_4(%arg0: i32, %arg1: i32) -> (i32, i32, i32) {
    %c0_i32 = arith.constant 0 : i32
    %c0_i32_0 = arith.constant 0 : i32
    return %arg0, %c0_i32, %arg1 : i32, i32, i32
  }
}

</mosaic_0001>

<llo_original>
// kernel: tpu_custom_call.1
$region0: #{tpu_custom_call.1}
  #allocation0 [shape = 'u32[]', space=smem, size = 0x4, offset = 0x4, fixed_abs, tag = 'smem constant byte address 0x4 - core index']
  #allocation1 [shape = 'u32[72,128]{1,0:T(1,128)}', space=vmem, size = 0x9000, scoped, tag = 'internal scratch']
  %s0 = inlined_call_operand.hbm [shape: f32[2,8,256], index: 0, kind: input, shape index: {}]
  %s1 = inlined_call_operand.hbm [shape: f32[2,8,256], index: 1, kind: input, shape index: {}]
  %s2 = inlined_call_operand.vmem [shape: f32[24,40], index: 2, kind: input, shape index: {}]
  %s3 = inlined_call_operand.vmem [shape: f32[24,1], index: 3, kind: input, shape index: {}]
  %s4 = inlined_call_operand.hbm [shape: f32[2,24,128], index: 4, kind: output, shape index: {}]
  %s5 = sld [smem:[#allocation0]]
  $region57: #{tpu_custom_call.1} parent=0
    _
  %s7 = ssub.s32 1, %s5
  %s8 = scalar_select 0, %s7, %s5
  $region1: #{tpu_custom_call.1} parent=0
    #allocation2 [shape = 'u8[8192]{0}', space=vmem, size = 0x2000, scoped, tag = 'input window, operand 0']
    #allocation3 [shape = 's32[2]{0}', space=sflag, size = 0x8, scoped, tag = 'scoped memory for tpu_custom_call.1']
    #allocation4 [shape = 's32[2]{0}', space=sflag, size = 0x8, scoped, tag = 'scoped memory for tpu_custom_call.1']
    #allocation5 [shape = 'u8[8192]{0}', space=vmem, size = 0x2000, scoped, tag = 'input window, operand 1']
    #allocation6 [shape = 's32[2]{0}', space=sflag, size = 0x8, scoped, tag = 'scoped memory for tpu_custom_call.1']
    #allocation7 [shape = 'u8[24576]{0}', space=vmem, size = 0x6000, scoped, tag = 'output window, operand 0']
    %9 = vsyncpa [#allocation3], 0
    %s10 = scalar_lea.sflag [#allocation3], 1
    %11 = vsyncpa %s10, 0
    %12 = vsyncpa [#allocation6], 0
    %s13 = scalar_lea.sflag [#allocation6], 1
    %14 = vsyncpa %s13, 0
    %15 = vsyncpa [#allocation4], 0
    %s16 = scalar_lea.sflag [#allocation4], 1
    %17 = vsyncpa %s16, 0
    loop: start=0, step=1, limit=4
    $region2: #{tpu_custom_call.1} parent=1 // loop_pre_header
      _
    $region3: #{tpu_custom_call.1} parent=1 // loop_header
      %s19 = sphi 0, %s23
      %p20 = scmp.ge.s32.totalorder %s19, 4
      %s26 = sphi 0, %s38
      %s27 = sphi 0, %s34
      %s28 = sphi 0, %s26
      %s29 = sphi 0, %s27
      %s30 = sphi 0, %s28
      %s31 = sphi 0, %s29
      %s43 = sphi 0, %s45
      %s46 = sphi 0, %s43
      %s47 = sphi 0, %s46
      %s63 = sphi 0, %s47
      %s73 = sphi 0, %s75
      %s76 = sphi 0, %s73
      %s77 = sphi 0, %s76
      %s93 = sphi 0, %s77
      %s97 = sphi 0, %s97
      %s99 = sphi 0, %s97
      %s100 = sphi 0, %s99
      %s114 = sphi 0, %s100
      %s118 = sphi 0, %s118
      %s120 = sphi 0, %s118
      %s121 = sphi 0, %s120
      %s135 = sphi 0, %s121
      %s143 = sphi 0, %s145
      %s146 = sphi 0, %s143
      %s147 = sphi 0, %s146
      %s163 = sphi 0, %s147
    $region4: #{tpu_custom_call.1} parent=1 // loop_header_branch
      %22 = sbr.rel (%p20) target = $region8
    $region5: #{tpu_custom_call.1} parent=1 // loop_body
      %s24 = ssub.s32 %s19, 1
      %s25 = ssub.s32 %s19, 2
      %s32 = sadd.s32 1, %s27
      %p33 = scmp.ge.s32.totalorder %s32, 1
      %s34 = scalar_select %p33, 0, %s32
      %s35 = sadd.s32 1, %s26
      %s36 = scalar_select %p33, %s35, %s26
      %p37 = scmp.ge.s32.totalorder %s36, 2
      %s38 = scalar_select %p37, 0, %s36
      %s39 = ssub.s32 %s26, %s38
      %s40 = ssub.s32 %s27, %s34
      %s41 = sor.u32 %s39, %s40
      %p42 = scmp.eq.s32.totalorder %s41, 0
      %s44 = sadd.s32 %s43, 1
      %s45 = scalar_select %p42, %s43, %s44
      %p48 = pneg %p42
      %p49 = scmp.eq.s32.totalorder %s19, 1
      %p50 = por %p48, %p49
      %p51 = scmp.ne.s32.totalorder %s43, %s46
      %p52 = scmp.eq.s32.totalorder %s19, 0
      %p53 = por %p51, %p52
      %p54 = scmp.ne.s32.totalorder %s43, %s46
      %p55 = scmp.eq.s32.totalorder %s24, 1
      %p56 = por %p54, %p55
      %p57 = scmp.ne.s32.totalorder %s46, %s47
      %p58 = scmp.eq.s32.totalorder %s24, 0
      %p59 = por %p57, %p58
      %p60 = scmp.ne.s32.totalorder %s46, %s47
      %p61 = scmp.eq.s32.totalorder %s25, 1
      %p62 = por %p60, %p61
      %p64 = scmp.ne.s32.totalorder %s47, %s63
      %p65 = scmp.eq.s32.totalorder %s25, 0
      %p66 = por %p64, %p65
      %s67 = sadd.s32 %s27, 1
      %s68 = sadd.s32 %s34, 1
      %s69 = ssub.s32 %s26, %s38
      %s70 = ssub.s32 %s67, %s68
      %s71 = sor.u32 %s69, %s70
      %p72 = scmp.eq.s32.totalorder %s71, 0
      %s74 = sadd.s32 %s73, 1
      %s75 = scalar_select %p72, %s73, %s74
      %p78 = pneg %p72
      %p79 = scmp.eq.s32.totalorder %s19, 1
      %p80 = por %p78, %p79
      %p81 = scmp.ne.s32.totalorder %s73, %s76
      %p82 = scmp.eq.s32.totalorder %s19, 0
      %p83 = por %p81, %p82
      %p84 = scmp.ne.s32.totalorder %s73, %s76
      %p85 = scmp.eq.s32.totalorder %s24, 1
      %p86 = por %p84, %p85
      %p87 = scmp.ne.s32.totalorder %s76, %s77
      %p88 = scmp.eq.s32.totalorder %s24, 0
      %p89 = por %p87, %p88
      %p90 = scmp.ne.s32.totalorder %s76, %s77
      %p91 = scmp.eq.s32.totalorder %s25, 1
      %p92 = por %p90, %p91
      %p94 = scmp.ne.s32.totalorder %s77, %s93
      %p95 = scmp.eq.s32.totalorder %s25, 0
      %p96 = por %p94, %p95
      %s98 = sadd.s32 %s97, 1
      %p101 = scmp.eq.s32.totalorder %s19, 1
      %p102 = scmp.ne.s32.totalorder %s97, %s99
      %p103 = scmp.eq.s32.totalorder %s19, 0
      %p104 = por %p102, %p103
      %p105 = scmp.ne.s32.totalorder %s97, %s99
      %p106 = scmp.eq.s32.totalorder %s24, 1
      %p107 = por %p105, %p106
      %p108 = scmp.ne.s32.totalorder %s99, %s100
      %p109 = scmp.eq.s32.totalorder %s24, 0
      %p110 = por %p108, %p109
      %p111 = scmp.ne.s32.totalorder %s99, %s100
      %p112 = scmp.eq.s32.totalorder %s25, 1
      %p113 = por %p111, %p112
      %p115 = scmp.ne.s32.totalorder %s100, %s114
      %p116 = scmp.eq.s32.totalorder %s25, 0
      %p117 = por %p115, %p116
      %s119 = sadd.s32 %s118, 1
      %p122 = scmp.eq.s32.totalorder %s19, 1
      %p123 = scmp.ne.s32.totalorder %s118, %s120
      %p124 = scmp.eq.s32.totalorder %s19, 0
      %p125 = por %p123, %p124
      %p126 = scmp.ne.s32.totalorder %s118, %s120
      %p127 = scmp.eq.s32.totalorder %s24, 1
      %p128 = por %p126, %p127
      %p129 = scmp.ne.s32.totalorder %s120, %s121
      %p130 = scmp.eq.s32.totalorder %s24, 0
      %p131 = por %p129, %p130
      %p132 = scmp.ne.s32.totalorder %s120, %s121
      %p133 = scmp.eq.s32.totalorder %s25, 1
      %p134 = por %p132, %p133
      %p136 = scmp.ne.s32.totalorder %s121, %s135
      %p137 = scmp.eq.s32.totalorder %s25, 0
      %p138 = por %p136, %p137
      %s139 = ssub.s32 %s26, %s38
      %s140 = ssub.s32 %s27, %s34
      %s141 = sor.u32 %s139, %s140
      %p142 = scmp.eq.s32.totalorder %s141, 0
      %s144 = sadd.s32 %s143, 1
      %s145 = scalar_select %p142, %s143, %s144
      %p148 = pneg %p142
      %p149 = scmp.eq.s32.totalorder %s19, 1
      %p150 = por %p148, %p149
      %p151 = scmp.ne.s32.totalorder %s143, %s146
      %p152 = scmp.eq.s32.totalorder %s19, 0
      %p153 = por %p151, %p152
      %p154 = scmp.ne.s32.totalorder %s143, %s146
      %p155 = scmp.eq.s32.totalorder %s24, 1
      %p156 = por %p154, %p155
      %p157 = scmp.ne.s32.totalorder %s146, %s147
      %p158 = scmp.eq.s32.totalorder %s24, 0
      %p159 = por %p157, %p158
      %p160 = scmp.ne.s32.totalorder %s146, %s147
      %p161 = scmp.eq.s32.totalorder %s25, 1
      %p162 = por %p160, %p161
      %p164 = scmp.ne.s32.totalorder %s147, %s163
      %p165 = scmp.eq.s32.totalorder %s25, 0
      %p166 = por %p164, %p165
      %p167 = scmp.le.s32.totalorder 1, %s19
      %p168 = scmp.lt.s32.totalorder %s19, 3
      %p169 = pnand %p167, %p168
      %p170 = pneg %p169
      // Predicated region
      $region9: #{tpu_custom_call.1} parent=5 // pred_check
        _
      $region10: #{tpu_custom_call.1} parent=5 // pred_check_branch
        %172 = sbr.rel (%p169) target = $region12
      $region11: #{tpu_custom_call.1} parent=5 // pred_region
        %s173 = ssub.s32 %s19, 1
        // Predicated region
        $region13: #{tpu_custom_call.1} parent=11 // pred_check
          %p174 = pneg %p110
        $region14: #{tpu_custom_call.1} parent=11 // pred_check_branch
          %176 = sbr.rel (%p174) target = $region16
        $region15: #{tpu_custom_call.1} parent=11 // pred_region
          _
        $region16: #{tpu_custom_call.1} parent=11 // pred_fallthru
          _
        // Predicated region
        $region17: #{tpu_custom_call.1} parent=11 // pred_check
          %p177 = pneg %p131
        $region18: #{tpu_custom_call.1} parent=11 // pred_check_branch
          %179 = sbr.rel (%p177) target = $region20
        $region19: #{tpu_custom_call.1} parent=11 // pred_region
          _
        $region20: #{tpu_custom_call.1} parent=11 // pred_fallthru
          _
      $region12: #{tpu_custom_call.1} parent=5 // pred_fallthru
        _
      %p180 = scmp.lt.s32.totalorder %s19, 2
      // Predicated region
      $region21: #{tpu_custom_call.1} parent=5 // pred_check
        %p181 = pneg %p180
      $region22: #{tpu_custom_call.1} parent=5 // pred_check_branch
        %183 = sbr.rel (%p181) target = $region24
      $region23: #{tpu_custom_call.1} parent=5 // pred_region
        // Predicated region
        $region25: #{tpu_custom_call.1} parent=23 // pred_check
          %p184 = pneg %p53
        $region26: #{tpu_custom_call.1} parent=23 // pred_check_branch
          %186 = sbr.rel (%p184) target = $region28
        $region27: #{tpu_custom_call.1} parent=23 // pred_region
          %s187 = sand.u32 %s43, 1
          %s188 = scalar_lea.sflag [#allocation3], %s187
          %s189 = sand.u32 %s43, 1
          %s190 = smul.addr %s189, 8
          %s191 = scalar_lea.vmem [#allocation2], %s190
          %193 = vsyncadd %s188, 0
          %s194 = smul.addr %s26, 2
          %s195 = sadd.s32 %s27, %s194
          %s196 = smul.addr %s195, 8
          %s197 = scalar_lea.hbm %s0, %s196
          %s199 = sshll.u32 %s197, 4
          %s200 = int_to_ptr.hbm [resolvable:$true] %s199
          %s201 = sshll.u32 %s191, 4
          %s202 = int_to_ptr.vmem [resolvable:$true] %s201
          %204 = dma.hbm_to_vmem [thread:$0]  %s200, 128, %s202, %s188
        $region28: #{tpu_custom_call.1} parent=23 // pred_fallthru
          _
        // Predicated region
        $region29: #{tpu_custom_call.1} parent=23 // pred_check
          %p205 = pneg %p83
        $region30: #{tpu_custom_call.1} parent=23 // pred_check_branch
          %207 = sbr.rel (%p205) target = $region32
        $region31: #{tpu_custom_call.1} parent=23 // pred_region
          %s208 = sand.u32 %s73, 1
          %s209 = scalar_lea.sflag [#allocation6], %s208
          %s210 = sand.u32 %s73, 1
          %s211 = smul.addr %s210, 8
          %s212 = scalar_lea.vmem [#allocation5], %s211
          %s213 = sadd.s32 %s27, 1
          %215 = vsyncadd %s209, 0
          %s216 = smul.addr %s26, 2
          %s217 = sadd.s32 %s213, %s216
          %s218 = smul.addr %s217, 8
          %s219 = scalar_lea.hbm %s1, %s218
          %s221 = sshll.u32 %s219, 4
          %s222 = int_to_ptr.hbm [resolvable:$true] %s221
          %s223 = sshll.u32 %s212, 4
          %s224 = int_to_ptr.vmem [resolvable:$true] %s223
          %226 = dma.hbm_to_vmem [thread:$0]  %s222, 128, %s224, %s209
        $region32: #{tpu_custom_call.1} parent=23 // pred_fallthru
          _
      $region24: #{tpu_custom_call.1} parent=5 // pred_fallthru
        _
      %p227 = scmp.le.s32.totalorder 1, %s19
      %p228 = scmp.lt.s32.totalorder %s19, 3
      %p229 = pnand %p227, %p228
      %p230 = pneg %p229
      // Predicated region
      $region33: #{tpu_custom_call.1} parent=5 // pred_check
        _
      $region34: #{tpu_custom_call.1} parent=5 // pred_check_branch
        %232 = sbr.rel (%p229) target = $region36
      $region35: #{tpu_custom_call.1} parent=5 // pred_region
        %s233 = ssub.s32 %s19, 1
        %s234 = sand.u32 %s46, 1
        %s235 = scalar_lea.sflag [#allocation3], %s234
        %s236 = sand.u32 %s46, 1
        %s237 = smul.addr %s236, 8
        %s238 = scalar_lea.vmem [#allocation2], %s237
        // Predicated region
        $region37: #{tpu_custom_call.1} parent=35 // pred_check
          %p239 = pneg %p59
        $region38: #{tpu_custom_call.1} parent=35 // pred_check_branch
          %241 = sbr.rel (%p239) target = $region40
        $region39: #{tpu_custom_call.1} parent=35 // pred_region
          %243 = dma.done %s235, 128
        $region40: #{tpu_custom_call.1} parent=35 // pred_fallthru
          _
        %s244 = sand.u32 %s76, 1
        %s245 = scalar_lea.sflag [#allocation6], %s244
        %s246 = sand.u32 %s76, 1
        %s247 = smul.addr %s246, 8
        %s248 = scalar_lea.vmem [#allocation5], %s247
        // Predicated region
        $region41: #{tpu_custom_call.1} parent=35 // pred_check
          %p249 = pneg %p89
        $region42: #{tpu_custom_call.1} parent=35 // pred_check_branch
          %251 = sbr.rel (%p249) target = $region44
        $region43: #{tpu_custom_call.1} parent=35 // pred_region
          %253 = dma.done %s245, 128
        $region44: #{tpu_custom_call.1} parent=35 // pred_fallthru
          _
        %s254 = sand.u32 %s46, 1
        %s255 = scalar_lea.sflag [#allocation3], %s254
        %s256 = sand.u32 %s46, 1
        %s257 = smul.addr %s256, 8
        %s258 = scalar_lea.vmem [#allocation2], %s257
        %p259 = pneg %p59
        %p260 = pneg %p56
        %s261 = sand.u32 %s76, 1
        %s262 = scalar_lea.sflag [#allocation6], %s261
        %s263 = sand.u32 %s76, 1
        %s264 = smul.addr %s263, 8
        %s265 = scalar_lea.vmem [#allocation5], %s264
        %p266 = pneg %p89
        %p267 = pneg %p86
        %p268 = pneg %p110
        %p269 = pneg %p107
        %p270 = pneg %p131
        %p271 = pneg %p128
        %p272 = pneg %p159
        %p273 = pneg %p156
        %s274 = sand.u32 %s146, 1
        %s275 = scalar_lea.sflag [#allocation4], %s274
        %s276 = sand.u32 %s146, 1
        %s277 = smul.addr %s276, 24
        %s278 = scalar_lea.vmem [#allocation7], %s277
        %s279 = sadd.s32 %s29, 1
        %v280 = vld [vmem:[%s238] sm:$0xff]
        %v281 = vld [vmem:[%s248] sm:$0xff]
        %284 = vrot.lane.b32.xlu0 %v280, 127
        %v285 = vpop.permute.xlu0 %284
        %286 = vrot.lane.b32.xlu0 %v281, 127
        %v287 = vpop.permute.xlu0 %286
        %vm288 = vcmask 1039360
        %v289 = vsel %vm288, %v285, %v287
        %291 = vrot.lane.b32.xlu0 %v280, 126
        %v292 = vpop.permute.xlu0 %291
        %293 = vrot.lane.b32.xlu0 %v281, 126
        %v294 = vpop.permute.xlu0 %293
        %vm295 = vcmask 1031168
        %v296 = vsel %vm295, %v292, %v294
        %298 = vrot.lane.b32.xlu0 %v280, 125
        %v299 = vpop.permute.xlu0 %298
        %300 = vrot.lane.b32.xlu0 %v281, 125
        %v301 = vpop.permute.xlu0 %300
        %vm302 = vcmask 1022976
        %v303 = vsel %vm302, %v299, %v301
        %305 = vrot.lane.b32.xlu0 %v280, 124
        %v306 = vpop.permute.xlu0 %305
        %307 = vrot.lane.b32.xlu0 %v281, 124
        %v308 = vpop.permute.xlu0 %307
        %vm309 = vcmask 1014784
        %v310 = vsel %vm309, %v306, %v308
        %v312 = vld [vmem:[%s2] sm:$0xff]
        %v313 = vld [vmem:[%s2 + $0x8] sm:$0xff]
        %v314 = vld [vmem:[%s2 + $0x10] sm:$0xff]
        %v315 = vld [vmem:[%s3] sm:$0xff]
        %v316 = vld [vmem:[%s3 + $0x8] sm:$0xff]
        %v317 = vld [vmem:[%s3 + $0x10] sm:$0xff]
        %319 = vset.pattern.permute.xlu0 0
        %320 = vperm.xlu0 %319, %v315
        %v321 = vpop.permute.xlu0 %320
        %324 = vset.pattern.permute.xlu0 0
        %325 = vperm.xlu0 %324, %v316
        %v326 = vpop.permute.xlu0 %325
        %329 = vset.pattern.permute.xlu0 0
        %330 = vperm.xlu0 %329, %v317
        %v331 = vpop.permute.xlu0 %330
        %vm333 = vcmask 326656
        %v335 = vsel %vm333, %v312, 0
        %v338 = vsel %vm333, %v313, 0
        %v341 = vsel %vm333, %v314, 0
        %343 = vmatpush.msra.mxu0 0.0
        %344 = vmatpush.msra.mxu0 0.0
        %345 = vmatpush.msra.mxu0 0.0
        %346 = vmatpush.msra.mxu0 0.0
        %347 = vmatpush.msra.mxu0 0.0
        %348 = vmatpush.msra.mxu0 0.0
        %349 = vmatpush.msra.mxu0 0.0
        %350 = vmatpush.msra.mxu0 0.0
        %351 = vmatpush.msra.mxu0 0.0
        %352 = vmatpush.msra.mxu0 0.0
        %353 = vmatpush.msra.mxu0 0.0
        %354 = vmatpush.msra.mxu0 %v310
        %355 = vmatpush.msra.mxu0 %v303
        %356 = vmatpush.msra.mxu0 %v296
        %357 = vmatpush.msra.mxu0 %v289
        %358 = vmatpush.msra.mxu0 %v280
        %359 = vmatmul.f32.gmra.mxu0 %v335
        %v360 = vpop.f32.mrf.mxu0
        %v361 = vadd.f32 %v321, %v360
        %362 = vmatmul.f32.gmra.mxu0 %v338
        %v363 = vpop.f32.mrf.mxu0
        %v364 = vadd.f32 %v326, %v363
        %365 = vmatmul.f32.gmra.mxu0 %v341
        %v366 = vpop.f32.mrf.mxu0
        %v367 = vadd.f32 %v331, %v366
        %368 = vdwg.mxu0
        %369 = vst [vmem:[%s278] sm:$0xff] %v361
        %370 = vst [vmem:[%s278 + $0x8] sm:$0xff] %v364
        %371 = vst [vmem:[%s278 + $0x10] sm:$0xff] %v367
        %s372 = sand.u32 %s146, 1
        %s373 = scalar_lea.sflag [#allocation4], %s372
        %s374 = sand.u32 %s146, 1
        %s375 = smul.addr %s374, 24
        %s376 = scalar_lea.vmem [#allocation7], %s375
        // Predicated region
        $region45: #{tpu_custom_call.1} parent=35 // pred_check
          %p377 = pneg %p156
        $region46: #{tpu_custom_call.1} parent=35 // pred_check_branch
          %379 = sbr.rel (%p377) target = $region48
        $region47: #{tpu_custom_call.1} parent=35 // pred_region
          %381 = vsyncadd %s373, 0
          %s382 = smul.addr %s28, 3
          %s383 = sadd.s32 %s29, %s382
          %s384 = smul.addr %s383, 8
          %s385 = scalar_lea.hbm %s4, %s384
          %s386 = sshll.u32 %s376, 4
          %s387 = int_to_ptr.vmem [resolvable:$true] %s386
          %s388 = sshll.u32 %s385, 4
          %s389 = int_to_ptr.hbm [resolvable:$true] %s388
          %394 = dma.vmem_to_hbm [thread:$0]  %s387, 384, %s389, %s373, 128, 128, 8
        $region48: #{tpu_custom_call.1} parent=35 // pred_fallthru
          _
      $region36: #{tpu_custom_call.1} parent=5 // pred_fallthru
        _
      %p395 = scmp.le.s32.totalorder 2, %s19
      // Predicated region
      $region49: #{tpu_custom_call.1} parent=5 // pred_check
        %p396 = pneg %p395
      $region50: #{tpu_custom_call.1} parent=5 // pred_check_branch
        %398 = sbr.rel (%p396) target = $region52
      $region51: #{tpu_custom_call.1} parent=5 // pred_region
        %s399 = ssub.s32 %s19, 2
        // Predicated region
        $region53: #{tpu_custom_call.1} parent=51 // pred_check
          %p400 = pneg %p162
        $region54: #{tpu_custom_call.1} parent=51 // pred_check_branch
          %402 = sbr.rel (%p400) target = $region56
        $region55: #{tpu_custom_call.1} parent=51 // pred_region
          %s403 = sand.u32 %s147, 1
          %s404 = scalar_lea.sflag [#allocation4], %s403
          %s405 = sand.u32 %s147, 1
          %s406 = smul.addr %s405, 24
          %s407 = scalar_lea.vmem [#allocation7], %s406
          %409 = dma.done %s404, 384
        $region56: #{tpu_custom_call.1} parent=51 // pred_fallthru
          _
      $region52: #{tpu_custom_call.1} parent=5 // pred_fallthru
        _
    $region6: #{tpu_custom_call.1} parent=1 // loop_footer
      %s23 = sadd.s32 1, %s19
    $region7: #{tpu_custom_call.1} parent=1 // loop_footer_branch
      %18 = sbr.rel target = $region3
    $region8: #{tpu_custom_call.1} parent=1 // loop_exit
      _
    %410 = vsyncpa [#allocation3], 1
    %s411 = scalar_lea.sflag [#allocation3], 1
    %412 = vsyncpa %s411, 1
    %413 = vsyncpa [#allocation6], 1
    %s414 = scalar_lea.sflag [#allocation6], 1
    %415 = vsyncpa %s414, 1
    %416 = vsyncpa [#allocation4], 1
    %s417 = scalar_lea.sflag [#allocation4], 1
    %418 = vsyncpa %s417, 1

</llo_original>
